<compile_context>
chip_gen: v6e
topology: v6e:2x2x1
jax: 0.10.0
libtpu: 0.0.40
codegen_flags: <defaults>
</compile_context>

<pallas_src>
import jax
import jax.numpy as jnp
from jax.experimental import pallas as pl
from jax.experimental.pallas import tpu as pltpu


def _round_up(x, m):
    return (x + m - 1) // m * m


# ---------------------------------------------------------------------------
# Pallas kernel: fused  matmul (im2col conv)  +  bias  +  PReLU
# ---------------------------------------------------------------------------
def _conv_prelu_kernel(p_ref, w_ref, b_ref, a_ref, o_ref):
    # p_ref: (TILE_M, K_pad)  bf16 im2col patches        (pipelined over M)
    # w_ref: (K_pad, Co_pad)  bf16 reshaped conv weight  (VMEM-resident)
    # b_ref: (1, Co_pad)      f32  bias                  (VMEM-resident)
    # a_ref: (1, Co_pad)      f32  PReLU per-channel slope
    # o_ref: (TILE_M, Co_pad) f32  output block (lane-dense, 128-multiple)
    acc = jnp.dot(p_ref[...], w_ref[...], preferred_element_type=jnp.float32)
    y = acc + b_ref[...]                      # f32 epilogue on f32 accumulator
    o_ref[...] = jnp.where(y > 0, y, a_ref[...] * y)


# ---------------------------------------------------------------------------
# Glue: im2col patch extraction (pure data movement, no FLOPs)
# ---------------------------------------------------------------------------
def _im2col(x_nhwc, kh, kw, stride, pad):
    # TODO(synk): replace with in-kernel halo DMA to avoid the KH*KW-fold
    #             duplication of the input in HBM.
    N, H, W, C = x_nhwc.shape
    xp = jnp.pad(x_nhwc, ((0, 0), (pad, pad), (pad, pad), (0, 0)))
    OH = (H + 2 * pad - kh) // stride + 1
    OW = (W + 2 * pad - kw) // stride + 1
    cols = []
    for i in range(kh):
        for j in range(kw):
            cols.append(xp[:, i:i + stride * OH:stride, j:j + stride * OW:stride, :])
    patches = jnp.concatenate(cols, axis=-1)          # (N, OH, OW, KH*KW*C)
    return patches.reshape(N * OH * OW, kh * kw * C), OH, OW


_TILE_M_MAX = 512      # >=512-row tiles reach ~85% of HBM roofline in tile sweeps


def conv_prelu(x_nhwc, weight, bias, alpha, stride, pad):
    """One Conv2d(+bias) + PReLU block. weight is PyTorch layout (Co, Ci, KH, KW)."""
    Co, Ci, KH, KW = weight.shape
    patches, OH, OW = _im2col(x_nhwc, KH, KW, stride, pad)
    M, K = patches.shape

    # Lane-dense padding: K and Co up to multiples of 128; M tiled in 8-multiples.
    K_pad = _round_up(K, 128)
    Co_pad = _round_up(Co, 128)
    tile_m = min(_TILE_M_MAX, _round_up(M, 8))
    M_pad = _round_up(M, tile_m)

    patches_p = jnp.pad(patches, ((0, M_pad - M), (0, K_pad - K))).astype(jnp.bfloat16)

    # Weight K axis must match the im2col column ordering: idx = (kh*KW + kw)*Ci + ci.
    w2 = jnp.transpose(weight, (2, 3, 1, 0)).reshape(K, Co)
    w2 = jnp.pad(w2, ((0, K_pad - K), (0, Co_pad - Co))).astype(jnp.bfloat16)
    b2 = jnp.pad(bias.astype(jnp.float32), (0, Co_pad - Co)).reshape(1, Co_pad)
    a2 = jnp.pad(alpha.astype(jnp.float32), (0, Co_pad - Co)).reshape(1, Co_pad)

    grid = (M_pad // tile_m,)
    out = pl.pallas_call(
        _conv_prelu_kernel,
        out_shape=jax.ShapeDtypeStruct((M_pad, Co_pad), jnp.float32),
        grid=grid,
        in_specs=[
            # Patches stream through VMEM, double-buffered by the pipeline.
            # TODO(synk): sweep pipeline_mode=pl.Buffered(3) once DMA-exposed.
            pl.BlockSpec((tile_m, K_pad), lambda i: (i, 0)),
            # Weight / bias / alpha: constant index_map -> stay VMEM-resident.
            pl.BlockSpec((K_pad, Co_pad), lambda i: (0, 0)),
            pl.BlockSpec((1, Co_pad), lambda i: (0, 0)),
            pl.BlockSpec((1, Co_pad), lambda i: (0, 0)),
        ],
        out_specs=pl.BlockSpec((tile_m, Co_pad), lambda i: (i, 0)),
        compiler_params=pltpu.CompilerParams(
            dimension_semantics=("parallel",),   # shard M tiles across TCs (v7x)
            # Conservative explicit budget: double-buffered bf16 patch tiles +
            # f32 output tiles + resident weights fit with large headroom,
            # and 32 MiB is safe on v7x's 64 MiB/TC physical VMEM.
            vmem_limit_bytes=32 * 1024 * 1024,
        ),
    )(patches_p, w2, b2, a2)

    N = x_nhwc.shape[0]
    return out[:M, :Co].reshape(N, OH, OW, Co)


# ---------------------------------------------------------------------------
# Conv2 module: params + forward
# ---------------------------------------------------------------------------
def init_conv2_params(key, in_planes, out_planes, kernel_size=3):
    def conv_init(kk, ci, co, ks):
        fan_in = ci * ks * ks
        bound = 1.0 / (fan_in ** 0.5)
        kw_, kb_ = jax.random.split(kk)
        w = jax.random.uniform(kw_, (co, ci, ks, ks), jnp.float32, -bound, bound)
        b = jax.random.uniform(kb_, (co,), jnp.float32, -bound, bound)
        return w, b

    k1, k2 = jax.random.split(key)
    w1, b1 = conv_init(k1, in_planes, out_planes, kernel_size)
    w2, b2 = conv_init(k2, out_planes, out_planes, 3)
    a1 = jnp.full((out_planes,), 0.25, jnp.float32)   # PReLU default init
    a2 = jnp.full((out_planes,), 0.25, jnp.float32)
    return dict(w1=w1, b1=b1, a1=a1, w2=w2, b2=b2, a2=a2)


def conv2_forward(params, x_nchw, kernel_size=3, stride=2, padding=1):
    # x: NCHW (PyTorch) -> NHWC internally -> NCHW out
    # TODO(synk): fuse the two conv_prelu calls into a single pallas_call so
    #             the intermediate activation stays in VMEM.
    x = jnp.transpose(x_nchw, (0, 2, 3, 1))
    y = conv_prelu(x, params["w1"], params["b1"], params["a1"], stride, padding)
    y = conv_prelu(y, params["w2"], params["b2"], params["a2"], 1, padding)
    return jnp.transpose(y, (0, 3, 1, 2))


# Pure-JAX reference (same semantics as the PyTorch module) for a sanity check.
def conv2_reference(params, x_nchw, stride=2, padding=1):
    def block(x, w, b, a, s, p):
        y = jax.lax.conv_general_dilated(
            x, w, (s, s), [(p, p), (p, p)],
            dimension_numbers=("NCHW", "OIHW", "NCHW"))
        y = y + b[None, :, None, None]
        return jnp.where(y > 0, y, a[None, :, None, None] * y)

    y = block(x_nchw, params["w1"], params["b1"], params["a1"], stride, padding)
    return block(y, params["w2"], params["b2"], params["a2"], 1, padding)


if __name__ == "__main__":
    key = jax.random.PRNGKey(0)
    kp, kx = jax.random.split(key)

    in_planes, out_planes = 4, 8
    x = jax.random.normal(kx, (2, in_planes, 16, 16), jnp.float32)   # NCHW

    params = init_conv2_params(kp, in_planes, out_planes, kernel_size=3)

    out = conv2_forward(params, x, kernel_size=3, stride=2, padding=1)
    out = jax.block_until_ready(out)

    ref = jax.block_until_ready(conv2_reference(params, x, stride=2, padding=1))
    assert out.shape == ref.shape == (2, out_planes, 8, 8), out.shape
    max_err = float(jnp.max(jnp.abs(out - ref)))
    # bf16 matmul operands + f32 accumulation: errors are ~1e-3 at these scales.
    assert jnp.allclose(out, ref, rtol=2e-2, atol=2e-2), max_err

    print("KERNEL_OK")
</pallas_src>

<mosaic_0001>
module attributes {stable_mosaic.version = 11 : i64} {
  func.func @_conv_prelu_kernel(%arg0: i32, %arg1: memref<128x128xbf16, #tpu.memory_space<vmem>>, %arg2: memref<128x128xbf16, #tpu.memory_space<vmem>>, %arg3: memref<1x128xf32, #tpu.memory_space<vmem>>, %arg4: memref<1x128xf32, #tpu.memory_space<vmem>>, %arg5: memref<128x128xf32, #tpu.memory_space<vmem>>) attributes {dimension_semantics = [#tpu.dimension_semantics<parallel>], iteration_bounds = array<i64: 1>, scalar_prefetch = 0 : i64, scratch_operands = 0 : i64, tpu.core_type = #tpu.core_type<tc>, window_params = [{transform_indices = @transform_0, window_bounds = array<i64: 128, 128>}, {pipeline_mode = #tpu.pipeline_mode<synchronous>, transform_indices = @transform_1, window_bounds = array<i64: 128, 128>}, {pipeline_mode = #tpu.pipeline_mode<synchronous>, transform_indices = @transform_2, window_bounds = array<i64: 1, 128>}, {pipeline_mode = #tpu.pipeline_mode<synchronous>, transform_indices = @transform_3, window_bounds = array<i64: 1, 128>}, {transform_indices = @transform_4, window_bounds = array<i64: 128, 128>}]} {
    %c0 = arith.constant 0 : index
    %c0_0 = arith.constant 0 : index
    %0 = vector.load %arg1[%c0, %c0_0] : memref<128x128xbf16, #tpu.memory_space<vmem>>, vector<128x128xbf16>
    %c0_1 = arith.constant 0 : index
    %c0_2 = arith.constant 0 : index
    %1 = vector.load %arg2[%c0_1, %c0_2] : memref<128x128xbf16, #tpu.memory_space<vmem>>, vector<128x128xbf16>
    %cst = arith.constant dense<0.000000e+00> : vector<128x128xf32>
    %2 = tpu.matmul %0, %1, %cst {dimension_numbers = #tpu.dot_dimension_numbers<[1], [0], [0], [1], [0, 0, 1, 1], [], []>} : vector<128x128xbf16>, vector<128x128xbf16>, vector<128x128xf32> -> vector<128x128xf32>
    %c0_3 = arith.constant 0 : index
    %c0_4 = arith.constant 0 : index
    %3 = vector.load %arg3[%c0_3, %c0_4] : memref<1x128xf32, #tpu.memory_space<vmem>>, vector<1x128xf32>
    %4 = vector.broadcast %3 : vector<1x128xf32> to vector<128x128xf32>
    %5 = arith.addf %2, %4 : vector<128x128xf32>
    %cst_5 = arith.constant 0.000000e+00 : f32
    %6 = vector.broadcast %cst_5 : f32 to vector<128x128xf32>
    %7 = arith.cmpf ogt, %5, %6 : vector<128x128xf32>
    %c0_6 = arith.constant 0 : index
    %c0_7 = arith.constant 0 : index
    %8 = vector.load %arg4[%c0_6, %c0_7] : memref<1x128xf32, #tpu.memory_space<vmem>>, vector<1x128xf32>
    %9 = vector.broadcast %8 : vector<1x128xf32> to vector<128x128xf32>
    %10 = arith.mulf %9, %5 : vector<128x128xf32>
    %11 = arith.select %7, %5, %10 : vector<128x128xi1>, vector<128x128xf32>
    %c0_8 = arith.constant 0 : index
    %c0_9 = arith.constant 0 : index
    %12 = vector.load %arg5[%c0_8, %c0_9] : memref<128x128xf32, #tpu.memory_space<vmem>>, vector<128x128xf32>
    tpu.vector_store %arg5[%c0_8, %c0_9], %11 {strides = array<i32>} : memref<128x128xf32, #tpu.memory_space<vmem>>, vector<128x128xf32>,
    return
  }
  func.func @transform_0(%arg0: i32) -> (i32, i32) {
    %c0_i32 = arith.constant 0 : i32
    %c0_i32_0 = arith.constant 0 : i32
    return %arg0, %c0_i32 : i32, i32
  }
  func.func @transform_1(%arg0: i32) -> (i32, i32) {
    %c0_i32 = arith.constant 0 : i32
    %c0_i32_0 = arith.constant 0 : i32
    %c0_i32_1 = arith.constant 0 : i32
    return %c0_i32, %c0_i32_0 : i32, i32
  }
  func.func @transform_2(%arg0: i32) -> (i32, i32) {
    %c0_i32 = arith.constant 0 : i32
    %c0_i32_0 = arith.constant 0 : i32
    %c0_i32_1 = arith.constant 0 : i32
    return %c0_i32, %c0_i32_0 : i32, i32
  }
  func.func @transform_3(%arg0: i32) -> (i32, i32) {
    %c0_i32 = arith.constant 0 : i32
    %c0_i32_0 = arith.constant 0 : i32
    %c0_i32_1 = arith.constant 0 : i32
    return %c0_i32, %c0_i32_0 : i32, i32
  }
  func.func @transform_4(%arg0: i32) -> (i32, i32) {
    %c0_i32 = arith.constant 0 : i32
    %c0_i32_0 = arith.constant 0 : i32
    return %arg0, %c0_i32 : i32, i32
  }
}

</mosaic_0001>

<llo_original>
// kernel: tpu_custom_call.1
$region0: #{tpu_custom_call.1}
  #allocation0 [shape = 'u32[]', space=smem, size = 0x4, offset = 0x4, fixed_abs, tag = 'smem constant byte address 0x4 - core index']
  #allocation1 [shape = 'u32[144,128]{1,0:T(1,128)}', space=vmem, size = 0x12000, scoped, tag = 'internal scratch']
  %s0 = inlined_call_operand.hbm [shape: bf16[128,128], index: 0, kind: input, shape index: {}]
  %s1 = inlined_call_operand.hbm [shape: bf16[128,128], index: 1, kind: input, shape index: {}]
  %s2 = inlined_call_operand.vmem [shape: f32[1,128], index: 2, kind: input, shape index: {}]
  %s3 = inlined_call_operand.vmem [shape: f32[1,128], index: 3, kind: input, shape index: {}]
  %s4 = inlined_call_operand.hbm [shape: f32[128,128], index: 4, kind: output, shape index: {}]
  %s5 = sld [smem:[#allocation0]]
  $region34: #{tpu_custom_call.1} parent=0
    _
  %s7 = ssub.s32 1, %s5
  %s8 = scalar_select 0, %s7, %s5
  $region1: #{tpu_custom_call.1} parent=0
    #allocation2 [shape = 'u8[32768]{0}', space=vmem, size = 0x8000, scoped, tag = 'input window, operand 0, single buffered']
    #allocation3 [shape = 's32[1]{0}', space=sflag, size = 0x4, scoped, tag = 'scoped memory for tpu_custom_call.1']
    #allocation4 [shape = 's32[1]{0}', space=sflag, size = 0x4, scoped, tag = 'scoped memory for tpu_custom_call.1']
    #allocation5 [shape = 'u8[32768]{0}', space=vmem, size = 0x8000, scoped, tag = 'input window, operand 1, single buffered']
    #allocation6 [shape = 's32[1]{0}', space=sflag, size = 0x4, scoped, tag = 'scoped memory for tpu_custom_call.1']
    #allocation7 [shape = 'u8[65536]{0}', space=vmem, size = 0x10000, scoped, tag = 'output window, operand 0, single buffered']
    %9 = vsyncpa [#allocation3], 0
    %10 = vsyncpa [#allocation6], 0
    %11 = vsyncpa [#allocation4], 0
    // Predicated region
    $region2: #{tpu_custom_call.1} parent=1 // pred_check
      _
    $region3: #{tpu_custom_call.1} parent=1 // pred_check_branch
      %13 = sbr.rel (0) target = $region5
    $region4: #{tpu_custom_call.1} parent=1 // pred_region
      %s15 = ssub.s32 1024, 1024
      %16 = vsyncadd [#allocation3], %s15
      %s17 = sshll.u32 [#allocation2], 4
      %s18 = int_to_ptr.vmem [resolvable:$true] %s17
      %23 = dma.hbm_to_vmem [thread:$0]  %s0, 1024, %s18, [#allocation3], 64, 64, 4
    $region5: #{tpu_custom_call.1} parent=1 // pred_fallthru
      _
    // Predicated region
    $region6: #{tpu_custom_call.1} parent=1 // pred_check
      _
    $region7: #{tpu_custom_call.1} parent=1 // pred_check_branch
      %25 = sbr.rel (0) target = $region9
    $region8: #{tpu_custom_call.1} parent=1 // pred_region
      %s27 = ssub.s32 1024, 1024
      %28 = vsyncadd [#allocation6], %s27
      %s29 = sshll.u32 [#allocation5], 4
      %s30 = int_to_ptr.vmem [resolvable:$true] %s29
      %35 = dma.hbm_to_vmem [thread:$0]  %s1, 1024, %s30, [#allocation6], 64, 64, 4
    $region9: #{tpu_custom_call.1} parent=1 // pred_fallthru
      _
    // Predicated region
    $region10: #{tpu_custom_call.1} parent=1 // pred_check
      _
    $region11: #{tpu_custom_call.1} parent=1 // pred_check_branch
      %37 = sbr.rel (0) target = $region13
    $region12: #{tpu_custom_call.1} parent=1 // pred_region
      _
    $region13: #{tpu_custom_call.1} parent=1 // pred_fallthru
      _
    // Predicated region
    $region14: #{tpu_custom_call.1} parent=1 // pred_check
      _
    $region15: #{tpu_custom_call.1} parent=1 // pred_check_branch
      %39 = sbr.rel (0) target = $region17
    $region16: #{tpu_custom_call.1} parent=1 // pred_region
      _
    $region17: #{tpu_custom_call.1} parent=1 // pred_fallthru
      _
    // Predicated region
    $region18: #{tpu_custom_call.1} parent=1 // pred_check
      _
    $region19: #{tpu_custom_call.1} parent=1 // pred_check_branch
      %41 = sbr.rel (0) target = $region21
    $region20: #{tpu_custom_call.1} parent=1 // pred_region
      %42 = dma.done [#allocation3], 1024
    $region21: #{tpu_custom_call.1} parent=1 // pred_fallthru
      _
    // Predicated region
    $region22: #{tpu_custom_call.1} parent=1 // pred_check
      _
    $region23: #{tpu_custom_call.1} parent=1 // pred_check_branch
      %44 = sbr.rel (0) target = $region25
    $region24: #{tpu_custom_call.1} parent=1 // pred_region
      %45 = dma.done [#allocation6], 1024
    $region25: #{tpu_custom_call.1} parent=1 // pred_fallthru
      _
    %v47 = vld [vmem:[#allocation2] sm:$0xf]
    %v48 = vld [vmem:[#allocation2 + $0x4] sm:$0xf]
    %v49 = vld [vmem:[#allocation2 + $0x8] sm:$0xf]
    %v50 = vld [vmem:[#allocation2 + $0xc] sm:$0xf]
    %v51 = vld [vmem:[#allocation2 + $0x10] sm:$0xf]
    %v52 = vld [vmem:[#allocation2 + $0x14] sm:$0xf]
    %v53 = vld [vmem:[#allocation2 + $0x18] sm:$0xf]
    %v54 = vld [vmem:[#allocation2 + $0x1c] sm:$0xf]
    %v55 = vld [vmem:[#allocation2 + $0x20] sm:$0xf]
    %v56 = vld [vmem:[#allocation2 + $0x24] sm:$0xf]
    %v57 = vld [vmem:[#allocation2 + $0x28] sm:$0xf]
    %v58 = vld [vmem:[#allocation2 + $0x2c] sm:$0xf]
    %v59 = vld [vmem:[#allocation2 + $0x30] sm:$0xf]
    %v60 = vld [vmem:[#allocation2 + $0x34] sm:$0xf]
    %v61 = vld [vmem:[#allocation2 + $0x38] sm:$0xf]
    %v62 = vld [vmem:[#allocation2 + $0x3c] sm:$0xf]
    %v63 = vld [vmem:[#allocation5] sm:$0xf]
    %v64 = vld [vmem:[#allocation5 + $0x4] sm:$0xf]
    %v65 = vld [vmem:[#allocation5 + $0x8] sm:$0xf]
    %v66 = vld [vmem:[#allocation5 + $0xc] sm:$0xf]
    %v67 = vld [vmem:[#allocation5 + $0x10] sm:$0xf]
    %v68 = vld [vmem:[#allocation5 + $0x14] sm:$0xf]
    %v69 = vld [vmem:[#allocation5 + $0x18] sm:$0xf]
    %v70 = vld [vmem:[#allocation5 + $0x1c] sm:$0xf]
    %v71 = vld [vmem:[#allocation5 + $0x20] sm:$0xf]
    %v72 = vld [vmem:[#allocation5 + $0x24] sm:$0xf]
    %v73 = vld [vmem:[#allocation5 + $0x28] sm:$0xf]
    %v74 = vld [vmem:[#allocation5 + $0x2c] sm:$0xf]
    %v75 = vld [vmem:[#allocation5 + $0x30] sm:$0xf]
    %v76 = vld [vmem:[#allocation5 + $0x34] sm:$0xf]
    %v77 = vld [vmem:[#allocation5 + $0x38] sm:$0xf]
    %v78 = vld [vmem:[#allocation5 + $0x3c] sm:$0xf]
    %v79 = vld [vmem:[%s2] sm:$0x1]
    %v81 = vlaneseq
    %v82 = vshrl.u32 %v81, 7
    %v83 = vsub.s32 0, %v82
    %v84 = vrot.slane %v79, %v83
    %v102 = vunpack.c.l.b16 %v47
    %v103 = vunpack.c.l.b16 %v48
    %v104 = vunpack.c.l.b16 %v49
    %v105 = vunpack.c.l.b16 %v50
    %v106 = vunpack.c.l.b16 %v51
    %v107 = vunpack.c.l.b16 %v52
    %v108 = vunpack.c.l.b16 %v53
    %v109 = vunpack.c.l.b16 %v54
    %v110 = vunpack.c.l.b16 %v55
    %v111 = vunpack.c.l.b16 %v56
    %v112 = vunpack.c.l.b16 %v57
    %v113 = vunpack.c.l.b16 %v58
    %v114 = vunpack.c.l.b16 %v59
    %v115 = vunpack.c.l.b16 %v60
    %v116 = vunpack.c.l.b16 %v61
    %v117 = vunpack.c.l.b16 %v62
    %v118 = vpack.c.b16 %v103, %v102
    %v119 = vpack.c.b16 %v105, %v104
    %v120 = vpack.c.b16 %v107, %v106
    %v121 = vpack.c.b16 %v109, %v108
    %v122 = vpack.c.b16 %v111, %v110
    %v123 = vpack.c.b16 %v113, %v112
    %v124 = vpack.c.b16 %v115, %v114
    %v125 = vpack.c.b16 %v117, %v116
    %v150 = vunpack.c.l.b16 %v63
    %v151 = vunpack.c.l.b16 %v64
    %v152 = vunpack.c.l.b16 %v65
    %v153 = vunpack.c.l.b16 %v66
    %v154 = vunpack.c.l.b16 %v67
    %v155 = vunpack.c.l.b16 %v68
    %v156 = vunpack.c.l.b16 %v69
    %v157 = vunpack.c.l.b16 %v70
    %v158 = vunpack.c.l.b16 %v71
    %v159 = vunpack.c.l.b16 %v72
    %v160 = vunpack.c.l.b16 %v73
    %v161 = vunpack.c.l.b16 %v74
    %v162 = vunpack.c.l.b16 %v75
    %v163 = vunpack.c.l.b16 %v76
    %v164 = vunpack.c.l.b16 %v77
    %v165 = vunpack.c.l.b16 %v78
    %v166 = vpack.c.b16 %v151, %v150
    %v167 = vpack.c.b16 %v153, %v152
    %v168 = vpack.c.b16 %v155, %v154
    %v169 = vpack.c.b16 %v157, %v156
    %v170 = vpack.c.b16 %v159, %v158
    %v171 = vpack.c.b16 %v161, %v160
    %v172 = vpack.c.b16 %v163, %v162
    %v173 = vpack.c.b16 %v165, %v164
    %182 = vmatprep.subr.bf16.mxu0 0
    %183 = vmatpush1.bf16.msra.mxu0 %v173
    %184 = vmatprep.subr.bf16.mxu0 0
    %185 = vmatpush1.bf16.msra.mxu0 %v172
    %186 = vmatprep.subr.bf16.mxu0 0
    %187 = vmatpush1.bf16.msra.mxu0 %v171
    %188 = vmatprep.subr.bf16.mxu0 0
    %189 = vmatpush1.bf16.msra.mxu0 %v170
    %190 = vmatprep.subr.bf16.mxu0 0
    %191 = vmatpush1.bf16.msra.mxu0 %v169
    %192 = vmatprep.subr.bf16.mxu0 0
    %193 = vmatpush1.bf16.msra.mxu0 %v168
    %194 = vmatprep.subr.bf16.mxu0 0
    %195 = vmatpush1.bf16.msra.mxu0 %v167
    %196 = vmatprep.subr.bf16.mxu0 0
    %197 = vmatpush1.bf16.msra.mxu0 %v166
    %198 = vmatprep.subr.bf16.mxu0 0
    %199 = vmatpush2.bf16.msra.mxu0 0
    %200 = vmatprep.subr.bf16.mxu0 0
    %201 = vmatpush2.bf16.msra.mxu0 0
    %202 = vmatprep.subr.bf16.mxu0 0
    %203 = vmatpush2.bf16.msra.mxu0 0
    %204 = vmatprep.subr.bf16.mxu0 0
    %205 = vmatpush2.bf16.msra.mxu0 0
    %206 = vmatprep.subr.bf16.mxu0 0
    %207 = vmatpush2.bf16.msra.mxu0 0
    %208 = vmatprep.subr.bf16.mxu0 0
    %209 = vmatpush2.bf16.msra.mxu0 0
    %210 = vmatprep.subr.bf16.mxu0 0
    %211 = vmatpush2.bf16.msra.mxu0 0
    %212 = vmatprep.subr.bf16.mxu0 0
    %213 = vmatpush2.bf16.msra.mxu0 0
    %214 = vmatprep.mubr.bf16.mxu0 0
    %215 = vmatmul.mubr.bf16.gmra.mxu0 %v118
    %v216 = vpop.f32.mrf.mxu0
    %v217 = vadd.f32 %v84, %v216
    %v218 = vpop.f32.mrf.mxu0
    %v219 = vpop.f32.mrf.mxu0
    %v220 = vadd.f32 %v84, %v219
    %v221 = vpop.f32.mrf.mxu0
    %222 = vmatprep.mubr.bf16.mxu0 0
    %223 = vmatmul.mubr.bf16.gmra.mxu0 %v119
    %v224 = vpop.f32.mrf.mxu0
    %v225 = vadd.f32 %v84, %v224
    %v226 = vpop.f32.mrf.mxu0
    %v227 = vpop.f32.mrf.mxu0
    %v228 = vadd.f32 %v84, %v227
    %v229 = vpop.f32.mrf.mxu0
    %230 = vmatprep.mubr.bf16.mxu0 0
    %231 = vmatmul.mubr.bf16.gmra.mxu0 %v120
    %v232 = vpop.f32.mrf.mxu0
    %v233 = vadd.f32 %v84, %v232
    %v234 = vpop.f32.mrf.mxu0
    %v235 = vpop.f32.mrf.mxu0
    %v236 = vadd.f32 %v84, %v235
    %v237 = vpop.f32.mrf.mxu0
    %238 = vmatprep.mubr.bf16.mxu0 0
    %239 = vmatmul.mubr.bf16.gmra.mxu0 %v121
    %v240 = vpop.f32.mrf.mxu0
    %v241 = vadd.f32 %v84, %v240
    %v242 = vpop.f32.mrf.mxu0
    %v243 = vpop.f32.mrf.mxu0
    %v244 = vadd.f32 %v84, %v243
    %v245 = vpop.f32.mrf.mxu0
    %246 = vmatprep.mubr.bf16.mxu0 0
    %247 = vmatmul.mubr.bf16.gmra.mxu0 %v122
    %v248 = vpop.f32.mrf.mxu0
    %v249 = vadd.f32 %v84, %v248
    %v250 = vpop.f32.mrf.mxu0
    %v251 = vpop.f32.mrf.mxu0
    %v252 = vadd.f32 %v84, %v251
    %v253 = vpop.f32.mrf.mxu0
    %254 = vmatprep.mubr.bf16.mxu0 0
    %255 = vmatmul.mubr.bf16.gmra.mxu0 %v123
    %v256 = vpop.f32.mrf.mxu0
    %v257 = vadd.f32 %v84, %v256
    %v258 = vpop.f32.mrf.mxu0
    %v259 = vpop.f32.mrf.mxu0
    %v260 = vadd.f32 %v84, %v259
    %v261 = vpop.f32.mrf.mxu0
    %262 = vmatprep.mubr.bf16.mxu0 0
    %263 = vmatmul.mubr.bf16.gmra.mxu0 %v124
    %v264 = vpop.f32.mrf.mxu0
    %v265 = vadd.f32 %v84, %v264
    %v266 = vpop.f32.mrf.mxu0
    %v267 = vpop.f32.mrf.mxu0
    %v268 = vadd.f32 %v84, %v267
    %v269 = vpop.f32.mrf.mxu0
    %270 = vmatprep.mubr.bf16.mxu0 0
    %271 = vmatmul.mubr.bf16.gmra.mxu0 %v125
    %v272 = vpop.f32.mrf.mxu0
    %v273 = vadd.f32 %v84, %v272
    %v274 = vpop.f32.mrf.mxu0
    %v275 = vpop.f32.mrf.mxu0
    %v276 = vadd.f32 %v84, %v275
    %v277 = vpop.f32.mrf.mxu0
    %278 = vdwg.mxu0
    %vm279 = vcmp.gt.f32.partialorder %v217, 0.0
    %vm280 = vcmp.gt.f32.partialorder %v220, 0.0
    %vm281 = vcmp.gt.f32.partialorder %v225, 0.0
    %vm282 = vcmp.gt.f32.partialorder %v228, 0.0
    %vm283 = vcmp.gt.f32.partialorder %v233, 0.0
    %vm284 = vcmp.gt.f32.partialorder %v236, 0.0
    %vm285 = vcmp.gt.f32.partialorder %v241, 0.0
    %vm286 = vcmp.gt.f32.partialorder %v244, 0.0
    %vm287 = vcmp.gt.f32.partialorder %v249, 0.0
    %vm288 = vcmp.gt.f32.partialorder %v252, 0.0
    %vm289 = vcmp.gt.f32.partialorder %v257, 0.0
    %vm290 = vcmp.gt.f32.partialorder %v260, 0.0
    %vm291 = vcmp.gt.f32.partialorder %v265, 0.0
    %vm292 = vcmp.gt.f32.partialorder %v268, 0.0
    %vm293 = vcmp.gt.f32.partialorder %v273, 0.0
    %vm294 = vcmp.gt.f32.partialorder %v276, 0.0
    %v295 = vld [vmem:[%s3] sm:$0x1]
    %v297 = vlaneseq
    %v298 = vshrl.u32 %v297, 7
    %v299 = vsub.s32 0, %v298
    %v300 = vrot.slane %v295, %v299
    %v302 = vmul.f32 %v300, %v217
    %v303 = vmul.f32 %v300, %v220
    %v304 = vmul.f32 %v300, %v225
    %v305 = vmul.f32 %v300, %v228
    %v306 = vmul.f32 %v300, %v233
    %v307 = vmul.f32 %v300, %v236
    %v308 = vmul.f32 %v300, %v241
    %v309 = vmul.f32 %v300, %v244
    %v310 = vmul.f32 %v300, %v249
    %v311 = vmul.f32 %v300, %v252
    %v312 = vmul.f32 %v300, %v257
    %v313 = vmul.f32 %v300, %v260
    %v314 = vmul.f32 %v300, %v265
    %v315 = vmul.f32 %v300, %v268
    %v316 = vmul.f32 %v300, %v273
    %v317 = vmul.f32 %v300, %v276
    %v318 = vsel %vm279, %v217, %v302
    %v319 = vsel %vm280, %v220, %v303
    %v320 = vsel %vm281, %v225, %v304
    %v321 = vsel %vm282, %v228, %v305
    %v322 = vsel %vm283, %v233, %v306
    %v323 = vsel %vm284, %v236, %v307
    %v324 = vsel %vm285, %v241, %v308
    %v325 = vsel %vm286, %v244, %v309
    %v326 = vsel %vm287, %v249, %v310
    %v327 = vsel %vm288, %v252, %v311
    %v328 = vsel %vm289, %v257, %v312
    %v329 = vsel %vm290, %v260, %v313
    %v330 = vsel %vm291, %v265, %v314
    %v331 = vsel %vm292, %v268, %v315
    %v332 = vsel %vm293, %v273, %v316
    %v333 = vsel %vm294, %v276, %v317
    %334 = vst [vmem:[#allocation7] sm:$0xff] %v318
    %335 = vst [vmem:[#allocation7 + $0x8] sm:$0xff] %v319
    %336 = vst [vmem:[#allocation7 + $0x10] sm:$0xff] %v320
    %337 = vst [vmem:[#allocation7 + $0x18] sm:$0xff] %v321
    %338 = vst [vmem:[#allocation7 + $0x20] sm:$0xff] %v322
    %339 = vst [vmem:[#allocation7 + $0x28] sm:$0xff] %v323
    %340 = vst [vmem:[#allocation7 + $0x30] sm:$0xff] %v324
    %341 = vst [vmem:[#allocation7 + $0x38] sm:$0xff] %v325
    %342 = vst [vmem:[#allocation7 + $0x40] sm:$0xff] %v326
    %343 = vst [vmem:[#allocation7 + $0x48] sm:$0xff] %v327
    %344 = vst [vmem:[#allocation7 + $0x50] sm:$0xff] %v328
    %345 = vst [vmem:[#allocation7 + $0x58] sm:$0xff] %v329
    %346 = vst [vmem:[#allocation7 + $0x60] sm:$0xff] %v330
    %347 = vst [vmem:[#allocation7 + $0x68] sm:$0xff] %v331
    %348 = vst [vmem:[#allocation7 + $0x70] sm:$0xff] %v332
    %349 = vst [vmem:[#allocation7 + $0x78] sm:$0xff] %v333
    // Predicated region
    $region26: #{tpu_custom_call.1} parent=1 // pred_check
      _
    $region27: #{tpu_custom_call.1} parent=1 // pred_check_branch
      %351 = sbr.rel (0) target = $region29
    $region28: #{tpu_custom_call.1} parent=1 // pred_region
      %s353 = ssub.s32 2048, 2048
      %354 = vsyncadd [#allocation4], %s353
      %s355 = sshll.u32 [#allocation7], 4
      %s356 = int_to_ptr.vmem [resolvable:$true] %s355
      %361 = dma.vmem_to_hbm [thread:$0]  %s356, 2048, %s4, [#allocation4], 128, 128, 8
    $region29: #{tpu_custom_call.1} parent=1 // pred_fallthru
      _
    // Predicated region
    $region30: #{tpu_custom_call.1} parent=1 // pred_check
      _
    $region31: #{tpu_custom_call.1} parent=1 // pred_check_branch
      %363 = sbr.rel (0) target = $region33
    $region32: #{tpu_custom_call.1} parent=1 // pred_region
      %364 = dma.done [#allocation4], 2048
    $region33: #{tpu_custom_call.1} parent=1 // pred_fallthru
      _
    %365 = vsyncpa [#allocation3], 1
    %366 = vsyncpa [#allocation6], 1
    %367 = vsyncpa [#allocation4], 1

</llo_original>
